<compile_context>
chip_gen: v7x
topology: tpu7x:2x2x1
jax: 0.10.0
libtpu: 0.0.40
codegen_flags: <defaults>
</compile_context>

<pallas_src>
import functools

import jax
import jax.numpy as jnp
from jax.experimental import pallas as pl
from jax.experimental.pallas import tpu as pltpu


def _round_up(x, m):
    return ((x + m - 1) // m) * m


def _embed_gather_kernel(ids_ref, table_ref, out_ref, *, n_tokens, block_tokens):
    """One grid step: gather up to `block_tokens` table rows into the (TB, E) tile.

    ids_ref   : SMEM int32[(n_pad,)]   -- scalar-prefetched token ids
    table_ref : VMEM (V, E)            -- embedding table (resident, constant index_map)
    out_ref   : VMEM (TB, E)           -- output tile for this token block
    """
    vocab = table_ref.shape[0]
    base = pl.program_id(0) * block_tokens
    # Tail block: only gather the tokens that actually exist (no wasted work).
    n_valid = jnp.minimum(block_tokens, n_tokens - base)

    def body(i, carry):
        # Scalar id from SMEM; clamp like jnp.take so bad ids cannot fault.
        row_id = ids_ref[base + i]
        row_id = jnp.minimum(jnp.maximum(row_id, 0), vocab - 1)
        # Dynamic-slice row gather: (1, E) load from the resident table,
        # (1, E) store into the lane-dense (TB, E=128) output tile.
        out_ref[pl.ds(i, 1), :] = table_ref[pl.ds(row_id, 1), :]
        return carry

    jax.lax.fori_loop(0, n_valid, body, 0)


def embedding_lookup(weight, ids, *, max_block_tokens=512):
    """weight: (V, E) float table; ids: integer array of any shape.
    Returns weight[ids] with shape ids.shape + (E,) (bit-exact gather)."""
    V, E = weight.shape
    flat = ids.reshape(-1).astype(jnp.int32)
    n = int(flat.shape[0])

    n_pad = _round_up(max(n, 1), 8)                   # sublane-aligned only
    tb = min(_round_up(max_block_tokens, 8), n_pad)   # tokens per grid step
    num_blocks = pl.cdiv(n_pad, tb)
    ids_pad = jnp.pad(flat, (0, n_pad - n))

    itemsize = jnp.dtype(weight.dtype).itemsize
    cp_kwargs = dict(dimension_semantics=("parallel",))   # independent token blocks
    vmem_needed = V * E * itemsize + 2 * tb * E * itemsize + (1 << 20)
    if vmem_needed > (32 << 20):                          # scoped default headroom
        cp_kwargs["vmem_limit_bytes"] = int(min(vmem_needed, 100 << 20))

    kernel = functools.partial(_embed_gather_kernel, n_tokens=n, block_tokens=tb)

    out = pl.pallas_call(
        kernel,
        out_shape=jax.ShapeDtypeStruct((n_pad, E), weight.dtype),
        grid_spec=pltpu.PrefetchScalarGridSpec(
            num_scalar_prefetch=1,                       # ids -> SMEM
            grid=(num_blocks,),
            in_specs=[
                pl.BlockSpec((V, E), lambda i, ids_sm: (0, 0)),   # table resident in VMEM
            ],
            out_specs=pl.BlockSpec((tb, E), lambda i, ids_sm: (i, 0)),
        ),
        compiler_params=pltpu.CompilerParams(**cp_kwargs),
    )(ids_pad, weight)

    return out[:n].reshape(ids.shape + (E,))


def embedding_forward(inputs, weight):
    """Mirrors Embedding.forward: x = inputs[0]; return embed(x)."""
    x = inputs[0]
    return embedding_lookup(weight, x)


if __name__ == "__main__":
    # Module config (small; embed_size=128 -> lane-dense output tiles).
    input_size = 512          # vocabulary size
    embed_size = 128

    # Inputs
    B, T = 2, 8
    root = jax.random.PRNGKey(0)
    k_w, k_x = jax.random.split(root)
    # nn.Embedding default init: N(0, 1)
    weight = jax.random.normal(k_w, (input_size, embed_size), jnp.float32)
    x = jax.random.randint(k_x, (B, T), 0, input_size, dtype=jnp.int32)

    inputs = (x,)             # forward() takes a sequence and uses inputs[0]
    out = embedding_forward(inputs, weight)
    jax.block_until_ready(out)

    # Pure-JAX reference: plain gather. The kernel gather is bit-exact.
    ref = jnp.take(weight, x, axis=0)
    assert out.shape == (B, T, embed_size)
    assert out.dtype == weight.dtype
    assert jnp.array_equal(out, ref)

    print("KERNEL_OK")
</pallas_src>

<mosaic_0001>
module attributes {stable_mosaic.version = 11 : i64} {
  func.func @_embed_gather_kernel(%arg0: i32, %arg1: memref<16xi32, #tpu.memory_space<smem>>, %arg2: memref<512x128xf32, #tpu.memory_space<vmem>>, %arg3: memref<16x128xf32, #tpu.memory_space<vmem>>) attributes {dimension_semantics = [#tpu.dimension_semantics<parallel>], iteration_bounds = array<i64: 1>, scalar_prefetch = 1 : i64, scratch_operands = 0 : i64, tpu.core_type = #tpu.core_type<tc>, window_params = [{pipeline_mode = #tpu.pipeline_mode<synchronous>, transform_indices = @transform_0, window_bounds = array<i64: 512, 128>}, {transform_indices = @transform_1, window_bounds = array<i64: 16, 128>}]} {
    %c16_i32 = arith.constant 16 : i32
    %0 = arith.muli %arg0, %c16_i32 : i32
    %c16_i32_0 = arith.constant 16 : i32
    %1 = arith.subi %c16_i32_0, %0 : i32
    %c16_i32_1 = arith.constant 16 : i32
    %2 = arith.minsi %c16_i32_1, %1 : i32
    %c0_i32 = arith.constant 0 : i32
    %c0_i32_2 = arith.constant 0 : i32
    %3 = arith.subi %2, %c0_i32_2 : i32
    %4 = arith.addi %c0_i32_2, %3 : i32
    %c1_i32 = arith.constant 1 : i32
    scf.for %arg4 = %c0_i32_2 to %4 step %c1_i32  : i32 {
      %5 = arith.addi %0, %arg4 : i32
      %6 = arith.index_cast %5 : i32 to index
      %7 = memref.load %arg1[%6] : memref<16xi32, #tpu.memory_space<smem>>
      %c0_i32_3 = arith.constant 0 : i32
      %8 = arith.maxsi %7, %c0_i32_3 : i32
      %c511_i32 = arith.constant 511 : i32
      %9 = arith.minsi %8, %c511_i32 : i32
      %10 = arith.index_cast %9 : i32 to index
      %c0 = arith.constant 0 : index
      %11 = vector.load %arg2[%10, %c0] : memref<512x128xf32, #tpu.memory_space<vmem>>, vector<1x128xf32>
      %12 = arith.index_cast %arg4 : i32 to index
      %c0_4 = arith.constant 0 : index
      %13 = vector.load %arg3[%12, %c0_4] : memref<16x128xf32, #tpu.memory_space<vmem>>, vector<1x128xf32>
      tpu.vector_store %arg3[%12, %c0_4], %11 {strides = array<i32>} : memref<16x128xf32, #tpu.memory_space<vmem>>, vector<1x128xf32>,
    }
    return
  }
  func.func @transform_0(%arg0: i32, %arg1: memref<16xi32, #tpu.memory_space<smem>>) -> (i32, i32) {
    %c0_i32 = arith.constant 0 : i32
    %c0_i32_0 = arith.constant 0 : i32
    %c0_i32_1 = arith.constant 0 : i32
    return %c0_i32, %c0_i32_0 : i32, i32
  }
  func.func @transform_1(%arg0: i32, %arg1: memref<16xi32, #tpu.memory_space<smem>>) -> (i32, i32) {
    %c0_i32 = arith.constant 0 : i32
    %c0_i32_0 = arith.constant 0 : i32
    return %arg0, %c0_i32 : i32, i32
  }
}

</mosaic_0001>

<llo_original>
// kernel: tpu_custom_call.1
$region0: #{tpu_custom_call.1}
  #allocation0 [shape = 'u32[]', space=smem, size = 0x4, offset = 0x4, fixed_abs, tag = 'smem constant byte address 0x4 - core index']
  #allocation1 [shape = 'u32[144,128]{1,0:T(1,128)}', space=vmem, size = 0x12000, scoped, tag = 'internal scratch']
  #allocation2 [shape = 's32[1]{0}', space=sflag, size = 0x4, scoped, tag = 'scoped memory for tpu_custom_call.1']
  #allocation3 [shape = 'u8[512]{0}', space=smem, size = 0x200, scoped, tag = 'prefetched SMEM operand 0']
  %s0 = inlined_call_operand.hbm [shape: s32[16], index: 0, kind: input, shape index: {}]
  %s1 = inlined_call_operand.hbm [shape: f32[512,128], index: 1, kind: input, shape index: {}]
  %s2 = inlined_call_operand.hbm [shape: f32[16,128], index: 2, kind: output, shape index: {}]
  %s3 = sld [smem:[#allocation0]]
  $region25: #{tpu_custom_call.1} parent=0
    _
  %s5 = ssub.s32 1, %s3
  %s6 = scalar_select 0, %s5, %s3
  %8 = dma.hbm_to_smem %s0, 16, [#allocation3], [#allocation2]
  %9 = dma.done [#allocation2], 16
  %10 = sfence
  $region1: #{tpu_custom_call.1} parent=0
    #allocation4 [shape = 'u8[262144]{0}', space=vmem, size = 0x40000, scoped, tag = 'input window, operand 1, single buffered']
    #allocation5 [shape = 's32[1]{0}', space=sflag, size = 0x4, scoped, tag = 'scoped memory for tpu_custom_call.1']
    #allocation6 [shape = 's32[1]{0}', space=sflag, size = 0x4, scoped, tag = 'scoped memory for tpu_custom_call.1']
    #allocation7 [shape = 'u8[8192]{0}', space=vmem, size = 0x2000, scoped, tag = 'output window, operand 0, single buffered']
    %11 = vsyncpa [#allocation5], 0
    %12 = vsyncpa [#allocation6], 0
    // Predicated region
    $region2: #{tpu_custom_call.1} parent=1 // pred_check
      _
    $region3: #{tpu_custom_call.1} parent=1 // pred_check_branch
      %14 = sbr.rel (0) target = $region5
    $region4: #{tpu_custom_call.1} parent=1 // pred_region
      %s16 = ssub.s32 8192, 8192
      %17 = vsyncadd [#allocation5], %s16
      %s18 = sshll.u32 [#allocation4], 4
      %s19 = int_to_ptr.vmem [resolvable:$true] %s18
      %24 = dma.hbm_to_vmem [thread:$0]  %s1, 8192, %s19, [#allocation5], 128, 128, 8
    $region5: #{tpu_custom_call.1} parent=1 // pred_fallthru
      _
    // Predicated region
    $region6: #{tpu_custom_call.1} parent=1 // pred_check
      _
    $region7: #{tpu_custom_call.1} parent=1 // pred_check_branch
      %26 = sbr.rel (0) target = $region9
    $region8: #{tpu_custom_call.1} parent=1 // pred_region
      %27 = dma.done [#allocation5], 8192
    $region9: #{tpu_custom_call.1} parent=1 // pred_fallthru
      _
    %s28 = smul.u32 0, 16
    %s29 = ssub.s32 16, %s28
    %p30 = scmp.lt.s32.totalorder %s29, 16
    %s31 = scalar_select %p30, %s29, 16
    // While loop
    $region10: #{tpu_custom_call.1} parent=1 // loop_pre_header
      _
    $region11: #{tpu_custom_call.1} parent=1 // loop_header
      %s33 = sphi 0, %s35
      %p34 = scmp.ge.s32.totalorder %s33, %s31
    $region12: #{tpu_custom_call.1} parent=1 // loop_header_branch
      %37 = sbr.rel (%p34) target = $region16
    $region13: #{tpu_custom_call.1} parent=1 // loop_body
      %s38 = sadd.s32 %s28, %s33
      %s39 = sld [smem:[#allocation3 + %s38]]
      %p40 = scmp.gt.s32.totalorder %s39, 0
      %s41 = scalar_select %p40, %s39, 0
      %p42 = scmp.lt.s32.totalorder %s41, 511
      %s43 = scalar_select %p42, %s41, 511
      %s44 = scalar_lea.vmem [#allocation4], %s43
      %v45 = vld [vmem:[%s44] sm:$0x1]
      %s46 = scalar_lea.vmem [#allocation7], %s33
      %47 = vst [vmem:[%s46] sm:$0x1] %v45
    $region14: #{tpu_custom_call.1} parent=1 // loop_footer
      %s35 = sadd.s32 %s33, 1
    $region15: #{tpu_custom_call.1} parent=1 // loop_footer_branch
      %32 = sbr.rel target = $region11
    $region16: #{tpu_custom_call.1} parent=1 // loop_exit
      _
    // Predicated region
    $region17: #{tpu_custom_call.1} parent=1 // pred_check
      _
    $region18: #{tpu_custom_call.1} parent=1 // pred_check_branch
      %49 = sbr.rel (0) target = $region20
    $region19: #{tpu_custom_call.1} parent=1 // pred_region
      %s51 = ssub.s32 256, 256
      %52 = vsyncadd [#allocation6], %s51
      %s53 = sshll.u32 [#allocation7], 4
      %s54 = int_to_ptr.vmem [resolvable:$true] %s53
      %59 = dma.vmem_to_hbm [thread:$0]  %s54, 256, %s2, [#allocation6], 128, 128, 8
    $region20: #{tpu_custom_call.1} parent=1 // pred_fallthru
      _
    // Predicated region
    $region21: #{tpu_custom_call.1} parent=1 // pred_check
      _
    $region22: #{tpu_custom_call.1} parent=1 // pred_check_branch
      %61 = sbr.rel (0) target = $region24
    $region23: #{tpu_custom_call.1} parent=1 // pred_region
      %62 = dma.done [#allocation6], 256
    $region24: #{tpu_custom_call.1} parent=1 // pred_fallthru
      _
    %63 = vsyncpa [#allocation5], 1
    %64 = vsyncpa [#allocation6], 1

</llo_original>
